<compile_context>
chip_gen: v7x
topology: tpu7x:2x2x1
jax: 0.10.0
libtpu: 0.0.40
codegen_flags: <defaults>
</compile_context>

<pallas_src>
import jax
import jax.numpy as jnp
from jax.experimental import pallas as pl
from jax.experimental.pallas import tpu as pltpu


# --------------------------------------------------------------------------
# Kernel: one (tr, H*W) tile of the per-channel scale.
# --------------------------------------------------------------------------

def _scale_kernel(x_ref, w_ref, o_ref):
    # x_ref: (tr, L), w_ref: (tr, 1) -> broadcast multiply along the lane axis.
    o_ref[...] = x_ref[...] * w_ref[...]


# --------------------------------------------------------------------------
# Host wrapper
# --------------------------------------------------------------------------

def _round_up(n, m):
    return (n + m - 1) // m * m


def _pick_row_tile(rows, lanes, itemsize, *, max_tile=512, max_tile_bytes=4 << 20):
    """8-aligned row tile: big enough to amortize per-step overhead (~0.35us),
    small enough that double-buffered in+out tiles fit the scoped-VMEM default,
    and preferably yielding >= 2 grid steps (v7x megacore sharding)."""
    tr = min(max_tile, _round_up(rows, 8))
    tr = max(8, tr - tr % 8)
    while tr > 8 and tr * lanes * itemsize > max_tile_bytes:
        tr = max(8, (tr // 2) // 8 * 8)
    if _round_up(rows, tr) // tr < 2 and tr >= 16:
        tr = max(8, (tr // 2) // 8 * 8)
    return tr


def scale_module_forward(x_nchw, weight):
    """_ScaleModule.forward: torch.mul(weight, x), weight dims (1, C, 1, 1)."""
    B, C, H, W = x_nchw.shape
    if weight.size != C:
        raise ValueError("expected a per-channel weight with dims (1, C, 1, 1)")
    # TODO(synk): only the per-channel (1, C, 1, 1) broadcast pattern used by WAKG
    #             is implemented; other arbitrary `dims` broadcasts are not.

    rows, lanes = B * C, H * W
    x2 = x_nchw.reshape(rows, lanes)                                 # zero-copy view
    w_col = jnp.tile(weight.reshape(C, 1).astype(x_nchw.dtype), (B, 1))  # (rows, 1)

    tr = _pick_row_tile(rows, lanes, x2.dtype.itemsize)
    rows_p = _round_up(rows, tr)
    if rows_p != rows:                                               # 8-aligned rows
        x2 = jnp.pad(x2, ((0, rows_p - rows), (0, 0)))
        w_col = jnp.pad(w_col, ((0, rows_p - rows), (0, 0)))

    out = pl.pallas_call(
        _scale_kernel,
        grid=(rows_p // tr,),
        in_specs=[pl.BlockSpec((tr, lanes), lambda i: (i, 0)),
                  pl.BlockSpec((tr, 1), lambda i: (i, 0))],
        out_specs=pl.BlockSpec((tr, lanes), lambda i: (i, 0)),
        out_shape=jax.ShapeDtypeStruct((rows_p, lanes), x2.dtype),
        compiler_params=pltpu.CompilerParams(
            dimension_semantics=("parallel",),
            vmem_limit_bytes=64 << 20),
    )(x2, w_col)

    return out[:rows].reshape(B, C, H, W)


# --------------------------------------------------------------------------

if __name__ == "__main__":
    key = jax.random.PRNGKey(0)
    kx1, kw1, kx2, kw2 = jax.random.split(key, 4)

    fwd = jax.jit(scale_module_forward)

    # base_scale usage in WAKG: dims=(1, C, 1, 1), init_scale=1.0 (here perturbed
    # so the correctness check is non-trivial).
    B, C, H, W = 2, 64, 16, 16
    x1 = jax.random.normal(kx1, (B, C, H, W), jnp.float32)
    w1 = 1.0 + 0.05 * jax.random.normal(kw1, (1, C, 1, 1), jnp.float32)
    y1 = fwd(x1, w1)
    jax.block_until_ready(y1)
    ref1 = w1 * x1
    assert y1.shape == x1.shape, y1.shape
    assert jnp.allclose(y1, ref1, rtol=1e-6, atol=1e-6), \
        float(jnp.max(jnp.abs(y1 - ref1)))

    # wavelet-branch usage in WAKG: dims=(1, 4*C, 1, 1), init_scale=0.1, applied at
    # half spatial resolution.
    B2, C2, H2, W2 = 2, 256, 8, 8
    x2 = jax.random.normal(kx2, (B2, C2, H2, W2), jnp.float32)
    w2 = (0.1 * jnp.ones((1, C2, 1, 1), jnp.float32)
          + 0.01 * jax.random.normal(kw2, (1, C2, 1, 1), jnp.float32))
    y2 = fwd(x2, w2)
    jax.block_until_ready(y2)
    ref2 = w2 * x2
    assert y2.shape == x2.shape, y2.shape
    assert jnp.allclose(y2, ref2, rtol=1e-6, atol=1e-6), \
        float(jnp.max(jnp.abs(y2 - ref2)))

    print("KERNEL_OK")
</pallas_src>

<mosaic_0001>
module attributes {stable_mosaic.version = 11 : i64} {
  func.func @_scale_kernel(%arg0: i32, %arg1: memref<64x256xf32, #tpu.memory_space<vmem>>, %arg2: memref<64x1xf32, #tpu.memory_space<vmem>>, %arg3: memref<64x256xf32, #tpu.memory_space<vmem>>) attributes {dimension_semantics = [#tpu.dimension_semantics<parallel>], iteration_bounds = array<i64: 2>, scalar_prefetch = 0 : i64, scratch_operands = 0 : i64, tpu.core_type = #tpu.core_type<tc>, window_params = [{transform_indices = @transform_0, window_bounds = array<i64: 64, 256>}, {transform_indices = @transform_1, window_bounds = array<i64: 64, 1>}, {transform_indices = @transform_2, window_bounds = array<i64: 64, 256>}]} {
    %c0 = arith.constant 0 : index
    %c0_0 = arith.constant 0 : index
    %0 = vector.load %arg1[%c0, %c0_0] : memref<64x256xf32, #tpu.memory_space<vmem>>, vector<64x256xf32>
    %c0_1 = arith.constant 0 : index
    %c0_2 = arith.constant 0 : index
    %1 = vector.load %arg2[%c0_1, %c0_2] : memref<64x1xf32, #tpu.memory_space<vmem>>, vector<64x1xf32>
    %2 = vector.broadcast %1 : vector<64x1xf32> to vector<64x256xf32>
    %3 = arith.mulf %0, %2 : vector<64x256xf32>
    %c0_3 = arith.constant 0 : index
    %c0_4 = arith.constant 0 : index
    %4 = vector.load %arg3[%c0_3, %c0_4] : memref<64x256xf32, #tpu.memory_space<vmem>>, vector<64x256xf32>
    tpu.vector_store %arg3[%c0_3, %c0_4], %3 {strides = array<i32>} : memref<64x256xf32, #tpu.memory_space<vmem>>, vector<64x256xf32>,
    return
  }
  func.func @transform_0(%arg0: i32) -> (i32, i32) {
    %c0_i32 = arith.constant 0 : i32
    %c0_i32_0 = arith.constant 0 : i32
    return %arg0, %c0_i32 : i32, i32
  }
  func.func @transform_1(%arg0: i32) -> (i32, i32) {
    %c0_i32 = arith.constant 0 : i32
    %c0_i32_0 = arith.constant 0 : i32
    return %arg0, %c0_i32 : i32, i32
  }
  func.func @transform_2(%arg0: i32) -> (i32, i32) {
    %c0_i32 = arith.constant 0 : i32
    %c0_i32_0 = arith.constant 0 : i32
    return %arg0, %c0_i32 : i32, i32
  }
}

</mosaic_0001>

<llo_original>
// kernel: scale_module_forward.1
$region0: #{scale_module_forward.1}
  #allocation0 [shape = 'u32[]', space=smem, size = 0x4, offset = 0x4, fixed_abs, tag = 'smem constant byte address 0x4 - core index']
  #allocation1 [shape = 'u32[144,128]{1,0:T(1,128)}', space=vmem, size = 0x12000, scoped, tag = 'internal scratch']
  %s0 = inlined_call_operand.hbm [shape: f32[128,256], index: 0, kind: input, shape index: {}]
  %s1 = inlined_call_operand.hbm [shape: f32[128,1], index: 1, kind: input, shape index: {}]
  %s2 = inlined_call_operand.hbm [shape: f32[128,256], index: 2, kind: output, shape index: {}]
  %s3 = sld [smem:[#allocation0]]
  $region49: #{scale_module_forward.1} parent=0
    _
  %s5 = ssub.s32 1, %s3
  %s6 = scalar_select 0, %s5, %s3
  $region1: #{scale_module_forward.1} parent=0
    #allocation2 [shape = 'u8[131072]{0}', space=vmem, size = 0x20000, scoped, tag = 'input window, operand 0']
    #allocation3 [shape = 's32[2]{0}', space=sflag, size = 0x8, scoped, tag = 'scoped memory for scale_module_forward.1']
    #allocation4 [shape = 's32[2]{0}', space=sflag, size = 0x8, scoped, tag = 'scoped memory for scale_module_forward.1']
    #allocation5 [shape = 'u8[65536]{0}', space=vmem, size = 0x10000, scoped, tag = 'input window, operand 1']
    #allocation6 [shape = 's32[2]{0}', space=sflag, size = 0x8, scoped, tag = 'scoped memory for scale_module_forward.1']
    #allocation7 [shape = 'u8[131072]{0}', space=vmem, size = 0x20000, scoped, tag = 'output window, operand 0']
    %7 = vsyncpa [#allocation3], 0
    %s8 = scalar_lea.sflag [#allocation3], 1
    %9 = vsyncpa %s8, 0
    %10 = vsyncpa [#allocation6], 0
    %s11 = scalar_lea.sflag [#allocation6], 1
    %12 = vsyncpa %s11, 0
    %13 = vsyncpa [#allocation4], 0
    %s14 = scalar_lea.sflag [#allocation4], 1
    %15 = vsyncpa %s14, 0
    loop: start=0, step=1, limit=4
    $region2: #{scale_module_forward.1} parent=1 // loop_pre_header
      _
    $region3: #{scale_module_forward.1} parent=1 // loop_header
      %s17 = sphi 0, %s21
      %p18 = scmp.ge.s32.totalorder %s17, 4
      %s27 = sphi 0, %s29
      %s30 = sphi 0, %s27
      %s31 = sphi 0, %s30
      %s47 = sphi 0, %s31
      %s53 = sphi 0, %s55
      %s56 = sphi 0, %s53
      %s57 = sphi 0, %s56
      %s73 = sphi 0, %s57
      %s79 = sphi 0, %s81
      %s82 = sphi 0, %s79
      %s83 = sphi 0, %s82
      %s99 = sphi 0, %s83
    $region4: #{scale_module_forward.1} parent=1 // loop_header_branch
      %20 = sbr.rel (%p18) target = $region8
    $region5: #{scale_module_forward.1} parent=1 // loop_body
      %s22 = ssub.s32 %s17, 1
      %s23 = ssub.s32 %s17, 2
      %s24 = sadd.s32 %s17, 1
      %s25 = ssub.s32 %s17, %s24
      %p26 = scmp.eq.s32.totalorder %s25, 0
      %s28 = sadd.s32 %s27, 1
      %s29 = scalar_select %p26, %s27, %s28
      %p32 = pneg %p26
      %p33 = scmp.eq.s32.totalorder %s17, 1
      %p34 = por %p32, %p33
      %p35 = scmp.ne.s32.totalorder %s27, %s30
      %p36 = scmp.eq.s32.totalorder %s17, 0
      %p37 = por %p35, %p36
      %p38 = scmp.ne.s32.totalorder %s27, %s30
      %p39 = scmp.eq.s32.totalorder %s22, 1
      %p40 = por %p38, %p39
      %p41 = scmp.ne.s32.totalorder %s30, %s31
      %p42 = scmp.eq.s32.totalorder %s22, 0
      %p43 = por %p41, %p42
      %p44 = scmp.ne.s32.totalorder %s30, %s31
      %p45 = scmp.eq.s32.totalorder %s23, 1
      %p46 = por %p44, %p45
      %p48 = scmp.ne.s32.totalorder %s31, %s47
      %p49 = scmp.eq.s32.totalorder %s23, 0
      %p50 = por %p48, %p49
      %s51 = ssub.s32 %s17, %s24
      %p52 = scmp.eq.s32.totalorder %s51, 0
      %s54 = sadd.s32 %s53, 1
      %s55 = scalar_select %p52, %s53, %s54
      %p58 = pneg %p52
      %p59 = scmp.eq.s32.totalorder %s17, 1
      %p60 = por %p58, %p59
      %p61 = scmp.ne.s32.totalorder %s53, %s56
      %p62 = scmp.eq.s32.totalorder %s17, 0
      %p63 = por %p61, %p62
      %p64 = scmp.ne.s32.totalorder %s53, %s56
      %p65 = scmp.eq.s32.totalorder %s22, 1
      %p66 = por %p64, %p65
      %p67 = scmp.ne.s32.totalorder %s56, %s57
      %p68 = scmp.eq.s32.totalorder %s22, 0
      %p69 = por %p67, %p68
      %p70 = scmp.ne.s32.totalorder %s56, %s57
      %p71 = scmp.eq.s32.totalorder %s23, 1
      %p72 = por %p70, %p71
      %p74 = scmp.ne.s32.totalorder %s57, %s73
      %p75 = scmp.eq.s32.totalorder %s23, 0
      %p76 = por %p74, %p75
      %s77 = ssub.s32 %s17, %s24
      %p78 = scmp.eq.s32.totalorder %s77, 0
      %s80 = sadd.s32 %s79, 1
      %s81 = scalar_select %p78, %s79, %s80
      %p84 = pneg %p78
      %p85 = scmp.eq.s32.totalorder %s17, 1
      %p86 = por %p84, %p85
      %p87 = scmp.ne.s32.totalorder %s79, %s82
      %p88 = scmp.eq.s32.totalorder %s17, 0
      %p89 = por %p87, %p88
      %p90 = scmp.ne.s32.totalorder %s79, %s82
      %p91 = scmp.eq.s32.totalorder %s22, 1
      %p92 = por %p90, %p91
      %p93 = scmp.ne.s32.totalorder %s82, %s83
      %p94 = scmp.eq.s32.totalorder %s22, 0
      %p95 = por %p93, %p94
      %p96 = scmp.ne.s32.totalorder %s82, %s83
      %p97 = scmp.eq.s32.totalorder %s23, 1
      %p98 = por %p96, %p97
      %p100 = scmp.ne.s32.totalorder %s83, %s99
      %p101 = scmp.eq.s32.totalorder %s23, 0
      %p102 = por %p100, %p101
      %p103 = scmp.le.s32.totalorder 1, %s17
      %p104 = scmp.lt.s32.totalorder %s17, 3
      %p105 = pnand %p103, %p104
      %p106 = pneg %p105
      // Predicated region
      $region9: #{scale_module_forward.1} parent=5 // pred_check
        _
      $region10: #{scale_module_forward.1} parent=5 // pred_check_branch
        %108 = sbr.rel (%p105) target = $region12
      $region11: #{scale_module_forward.1} parent=5 // pred_region
        %s109 = ssub.s32 %s17, 1
      $region12: #{scale_module_forward.1} parent=5 // pred_fallthru
        _
      %p110 = scmp.lt.s32.totalorder %s17, 2
      // Predicated region
      $region13: #{scale_module_forward.1} parent=5 // pred_check
        %p111 = pneg %p110
      $region14: #{scale_module_forward.1} parent=5 // pred_check_branch
        %113 = sbr.rel (%p111) target = $region16
      $region15: #{scale_module_forward.1} parent=5 // pred_region
        // Predicated region
        $region17: #{scale_module_forward.1} parent=15 // pred_check
          %p114 = pneg %p37
        $region18: #{scale_module_forward.1} parent=15 // pred_check_branch
          %116 = sbr.rel (%p114) target = $region20
        $region19: #{scale_module_forward.1} parent=15 // pred_region
          %s117 = sand.u32 %s27, 1
          %s118 = scalar_lea.sflag [#allocation3], %s117
          %s119 = sand.u32 %s27, 1
          %s120 = smul.addr %s119, 128
          %s121 = scalar_lea.vmem [#allocation2], %s120
          %s122 = smul.u32 8, %s17
          %s124 = ssub.s32 2048, 2048
          %125 = vsyncadd %s118, %s124
          %s126 = smul.addr %s122, 2
          %s127 = smul.addr %s126, 128
          %s128 = scalar_lea.hbm %s0, %s127
          %s129 = sshll.u32 %s121, 4
          %s130 = int_to_ptr.vmem [resolvable:$true] %s129
          %135 = dma.hbm_to_vmem [thread:$0]  %s128, 2048, %s130, %s118, 256, 256, 16
        $region20: #{scale_module_forward.1} parent=15 // pred_fallthru
          _
        // Predicated region
        $region21: #{scale_module_forward.1} parent=15 // pred_check
          %p136 = pneg %p63
        $region22: #{scale_module_forward.1} parent=15 // pred_check_branch
          %138 = sbr.rel (%p136) target = $region24
        $region23: #{scale_module_forward.1} parent=15 // pred_region
          %s139 = sand.u32 %s53, 1
          %s140 = scalar_lea.sflag [#allocation6], %s139
          %s141 = sand.u32 %s53, 1
          %s142 = smul.addr %s141, 64
          %s143 = scalar_lea.vmem [#allocation5], %s142
          %s144 = smul.u32 8, %s17
          %s146 = ssub.s32 1024, 1024
          %147 = vsyncadd %s140, %s146
          %s148 = smul.addr %s144, 128
          %s149 = scalar_lea.hbm %s1, %s148
          %s150 = sshll.u32 %s143, 4
          %s151 = int_to_ptr.vmem [resolvable:$true] %s150
          %156 = dma.hbm_to_vmem [thread:$0]  %s149, 1024, %s151, %s140, 128, 128, 8
        $region24: #{scale_module_forward.1} parent=15 // pred_fallthru
          _
      $region16: #{scale_module_forward.1} parent=5 // pred_fallthru
        _
      %p157 = scmp.le.s32.totalorder 1, %s17
      %p158 = scmp.lt.s32.totalorder %s17, 3
      %p159 = pnand %p157, %p158
      %p160 = pneg %p159
      // Predicated region
      $region25: #{scale_module_forward.1} parent=5 // pred_check
        _
      $region26: #{scale_module_forward.1} parent=5 // pred_check_branch
        %162 = sbr.rel (%p159) target = $region28
      $region27: #{scale_module_forward.1} parent=5 // pred_region
        %s163 = ssub.s32 %s17, 1
        %s164 = sand.u32 %s30, 1
        %s165 = scalar_lea.sflag [#allocation3], %s164
        %s166 = sand.u32 %s30, 1
        %s167 = smul.addr %s166, 128
        %s168 = scalar_lea.vmem [#allocation2], %s167
        // Predicated region
        $region29: #{scale_module_forward.1} parent=27 // pred_check
          %p169 = pneg %p43
        $region30: #{scale_module_forward.1} parent=27 // pred_check_branch
          %171 = sbr.rel (%p169) target = $region32
        $region31: #{scale_module_forward.1} parent=27 // pred_region
          %172 = dma.done %s165, 2048
        $region32: #{scale_module_forward.1} parent=27 // pred_fallthru
          _
        %s173 = sand.u32 %s56, 1
        %s174 = scalar_lea.sflag [#allocation6], %s173
        %s175 = sand.u32 %s56, 1
        %s176 = smul.addr %s175, 64
        %s177 = scalar_lea.vmem [#allocation5], %s176
        // Predicated region
        $region33: #{scale_module_forward.1} parent=27 // pred_check
          %p178 = pneg %p69
        $region34: #{scale_module_forward.1} parent=27 // pred_check_branch
          %180 = sbr.rel (%p178) target = $region36
        $region35: #{scale_module_forward.1} parent=27 // pred_region
          %181 = dma.done %s174, 1024
        $region36: #{scale_module_forward.1} parent=27 // pred_fallthru
          _
        %s182 = sand.u32 %s30, 1
        %s183 = scalar_lea.sflag [#allocation3], %s182
        %s184 = sand.u32 %s30, 1
        %s185 = smul.addr %s184, 128
        %s186 = scalar_lea.vmem [#allocation2], %s185
        %p187 = pneg %p43
        %p188 = pneg %p40
        %s189 = sand.u32 %s56, 1
        %s190 = scalar_lea.sflag [#allocation6], %s189
        %s191 = sand.u32 %s56, 1
        %s192 = smul.addr %s191, 64
        %s193 = scalar_lea.vmem [#allocation5], %s192
        %p194 = pneg %p69
        %p195 = pneg %p66
        %p196 = pneg %p95
        %p197 = pneg %p92
        %s198 = sand.u32 %s82, 1
        %s199 = scalar_lea.sflag [#allocation4], %s198
        %s200 = sand.u32 %s82, 1
        %s201 = smul.addr %s200, 128
        %s202 = scalar_lea.vmem [#allocation7], %s201
        %s203 = smul.u32 8, %s22
        %s204 = smul.u32 8, %s22
        %s205 = smul.u32 8, %s22
        %v206 = vld [vmem:[%s168] sm:$0xff]
        %v207 = vld [vmem:[%s168 + $0x8] sm:$0xff]
        %v208 = vld [vmem:[%s168 + $0x10] sm:$0xff]
        %v209 = vld [vmem:[%s168 + $0x18] sm:$0xff]
        %v210 = vld [vmem:[%s168 + $0x20] sm:$0xff]
        %v211 = vld [vmem:[%s168 + $0x28] sm:$0xff]
        %v212 = vld [vmem:[%s168 + $0x30] sm:$0xff]
        %v213 = vld [vmem:[%s168 + $0x38] sm:$0xff]
        %v214 = vld [vmem:[%s168 + $0x40] sm:$0xff]
        %v215 = vld [vmem:[%s168 + $0x48] sm:$0xff]
        %v216 = vld [vmem:[%s168 + $0x50] sm:$0xff]
        %v217 = vld [vmem:[%s168 + $0x58] sm:$0xff]
        %v218 = vld [vmem:[%s168 + $0x60] sm:$0xff]
        %v219 = vld [vmem:[%s168 + $0x68] sm:$0xff]
        %v220 = vld [vmem:[%s168 + $0x70] sm:$0xff]
        %v221 = vld [vmem:[%s168 + $0x78] sm:$0xff]
        %v222 = vld [vmem:[%s177] sm:$0xff]
        %v223 = vld [vmem:[%s177 + $0x8] sm:$0xff]
        %v224 = vld [vmem:[%s177 + $0x10] sm:$0xff]
        %v225 = vld [vmem:[%s177 + $0x18] sm:$0xff]
        %v226 = vld [vmem:[%s177 + $0x20] sm:$0xff]
        %v227 = vld [vmem:[%s177 + $0x28] sm:$0xff]
        %v228 = vld [vmem:[%s177 + $0x30] sm:$0xff]
        %v229 = vld [vmem:[%s177 + $0x38] sm:$0xff]
        %231 = vset.pattern.permute.xlu0 0
        %232 = vperm.xlu0 %231, %v222
        %v233 = vpop.permute.xlu0 %232
        %236 = vset.pattern.permute.xlu0 0
        %237 = vperm.xlu0 %236, %v223
        %v238 = vpop.permute.xlu0 %237
        %241 = vset.pattern.permute.xlu0 0
        %242 = vperm.xlu0 %241, %v224
        %v243 = vpop.permute.xlu0 %242
        %246 = vset.pattern.permute.xlu0 0
        %247 = vperm.xlu0 %246, %v225
        %v248 = vpop.permute.xlu0 %247
        %251 = vset.pattern.permute.xlu0 0
        %252 = vperm.xlu0 %251, %v226
        %v253 = vpop.permute.xlu0 %252
        %256 = vset.pattern.permute.xlu0 0
        %257 = vperm.xlu0 %256, %v227
        %v258 = vpop.permute.xlu0 %257
        %261 = vset.pattern.permute.xlu0 0
        %262 = vperm.xlu0 %261, %v228
        %v263 = vpop.permute.xlu0 %262
        %266 = vset.pattern.permute.xlu0 0
        %267 = vperm.xlu0 %266, %v229
        %v268 = vpop.permute.xlu0 %267
        %v270 = vmul.f32 %v206, %v233
        %v271 = vmul.f32 %v207, %v233
        %v272 = vmul.f32 %v208, %v238
        %v273 = vmul.f32 %v209, %v238
        %v274 = vmul.f32 %v210, %v243
        %v275 = vmul.f32 %v211, %v243
        %v276 = vmul.f32 %v212, %v248
        %v277 = vmul.f32 %v213, %v248
        %v278 = vmul.f32 %v214, %v253
        %v279 = vmul.f32 %v215, %v253
        %v280 = vmul.f32 %v216, %v258
        %v281 = vmul.f32 %v217, %v258
        %v282 = vmul.f32 %v218, %v263
        %v283 = vmul.f32 %v219, %v263
        %v284 = vmul.f32 %v220, %v268
        %v285 = vmul.f32 %v221, %v268
        %286 = vst [vmem:[%s202] sm:$0xff] %v270
        %287 = vst [vmem:[%s202 + $0x8] sm:$0xff] %v271
        %288 = vst [vmem:[%s202 + $0x10] sm:$0xff] %v272
        %289 = vst [vmem:[%s202 + $0x18] sm:$0xff] %v273
        %290 = vst [vmem:[%s202 + $0x20] sm:$0xff] %v274
        %291 = vst [vmem:[%s202 + $0x28] sm:$0xff] %v275
        %292 = vst [vmem:[%s202 + $0x30] sm:$0xff] %v276
        %293 = vst [vmem:[%s202 + $0x38] sm:$0xff] %v277
        %294 = vst [vmem:[%s202 + $0x40] sm:$0xff] %v278
        %295 = vst [vmem:[%s202 + $0x48] sm:$0xff] %v279
        %296 = vst [vmem:[%s202 + $0x50] sm:$0xff] %v280
        %297 = vst [vmem:[%s202 + $0x58] sm:$0xff] %v281
        %298 = vst [vmem:[%s202 + $0x60] sm:$0xff] %v282
        %299 = vst [vmem:[%s202 + $0x68] sm:$0xff] %v283
        %300 = vst [vmem:[%s202 + $0x70] sm:$0xff] %v284
        %301 = vst [vmem:[%s202 + $0x78] sm:$0xff] %v285
        %s302 = sand.u32 %s82, 1
        %s303 = scalar_lea.sflag [#allocation4], %s302
        %s304 = sand.u32 %s82, 1
        %s305 = smul.addr %s304, 128
        %s306 = scalar_lea.vmem [#allocation7], %s305
        // Predicated region
        $region37: #{scale_module_forward.1} parent=27 // pred_check
          %p307 = pneg %p92
        $region38: #{scale_module_forward.1} parent=27 // pred_check_branch
          %309 = sbr.rel (%p307) target = $region40
        $region39: #{scale_module_forward.1} parent=27 // pred_region
          %s310 = smul.u32 8, %s22
          %s312 = ssub.s32 2048, 2048
          %313 = vsyncadd %s303, %s312
          %s314 = smul.addr %s310, 2
          %s315 = smul.addr %s314, 128
          %s316 = scalar_lea.hbm %s2, %s315
          %s317 = sshll.u32 %s306, 4
          %s318 = int_to_ptr.vmem [resolvable:$true] %s317
          %323 = dma.vmem_to_hbm [thread:$0]  %s318, 2048, %s316, %s303, 256, 256, 16
        $region40: #{scale_module_forward.1} parent=27 // pred_fallthru
          _
      $region28: #{scale_module_forward.1} parent=5 // pred_fallthru
        _
      %p324 = scmp.le.s32.totalorder 2, %s17
      // Predicated region
      $region41: #{scale_module_forward.1} parent=5 // pred_check
        %p325 = pneg %p324
      $region42: #{scale_module_forward.1} parent=5 // pred_check_branch
        %327 = sbr.rel (%p325) target = $region44
      $region43: #{scale_module_forward.1} parent=5 // pred_region
        %s328 = ssub.s32 %s17, 2
        // Predicated region
        $region45: #{scale_module_forward.1} parent=43 // pred_check
          %p329 = pneg %p98
        $region46: #{scale_module_forward.1} parent=43 // pred_check_branch
          %331 = sbr.rel (%p329) target = $region48
        $region47: #{scale_module_forward.1} parent=43 // pred_region
          %s332 = sand.u32 %s83, 1
          %s333 = scalar_lea.sflag [#allocation4], %s332
          %s334 = sand.u32 %s83, 1
          %s335 = smul.addr %s334, 128
          %s336 = scalar_lea.vmem [#allocation7], %s335
          %337 = dma.done %s333, 2048
        $region48: #{scale_module_forward.1} parent=43 // pred_fallthru
          _
      $region44: #{scale_module_forward.1} parent=5 // pred_fallthru
        _
    $region6: #{scale_module_forward.1} parent=1 // loop_footer
      %s21 = sadd.s32 1, %s17
    $region7: #{scale_module_forward.1} parent=1 // loop_footer_branch
      %16 = sbr.rel target = $region3
    $region8: #{scale_module_forward.1} parent=1 // loop_exit
      _
    %338 = vsyncpa [#allocation3], 1
    %s339 = scalar_lea.sflag [#allocation3], 1
    %340 = vsyncpa %s339, 1
    %341 = vsyncpa [#allocation6], 1
    %s342 = scalar_lea.sflag [#allocation6], 1
    %343 = vsyncpa %s342, 1
    %344 = vsyncpa [#allocation4], 1
    %s345 = scalar_lea.sflag [#allocation4], 1
    %346 = vsyncpa %s345, 1

</llo_original>
